<compile_context>
chip_gen: v5e
topology: v5e:2x2
jax: 0.10.0
libtpu: 0.0.40
codegen_flags: <defaults>
</compile_context>

<pallas_src>
import functools

import jax
import jax.numpy as jnp
from jax.experimental import pallas as pl
from jax.experimental.pallas import tpu as pltpu

EPS = 1e-5


def _round_up(x, m):
    return (x + m - 1) // m * m


# --------------------------------------------------------------------------- #
# Kernel
# --------------------------------------------------------------------------- #
def mlp_agent_kernel(inp_ref, act_ref, hidn_ref, ids_ref,
                     ws1_obs_ref, ws1_act_ref, ws1_id_ref, ws1_hid_ref, bs1_ref,
                     wfc1_ref, b1_ref, wfc2_ref, b2_ref, lnw_ref, lnb_ref,
                     out_ref, *, hid, agent_num):
    """Feature-major fused forward.

    inp_ref  : [bt, obs_dim]     batch-major activation tiles (bf16 or f32)
    act_ref  : [bt, action_dim]
    hidn_ref : [bt, hid]
    ids_ref  : [1, bt] int32     agent ids (one-hot built in-kernel)
    ws1_*    : [3*hid, seg]      fused stage-1 weights: rows 0:h obs_enc,
                                 h:2h [act_enc | id_emb], 2h:3h fc1-hidden block
    out_ref  : [action_dim, bt]  feature-major output (lane-dense store)
    """
    f32 = jnp.float32
    bt = out_ref.shape[1]

    def dot_t(w, x):
        # [M, K] x [bt, K] -> [M, bt]; batch stays on the lane axis of the
        # result (trans-B matmul, same pattern as flash attention's q @ k^T).
        return jax.lax.dot_general(w, x, (((1,), (1,)), ((), ())),
                                   preferred_element_type=f32)

    # one_hot(ids) built in-kernel: [agent_num, bt]
    iota = jax.lax.broadcasted_iota(jnp.int32, (agent_num, bt), 0)
    onehot = (iota == ids_ref[...]).astype(ws1_id_ref.dtype)

    # Fused stage 1: one [3*hid, bt] pre-activation slab (f32 accumulation).
    pre = (dot_t(ws1_obs_ref[...], inp_ref[...])
           + dot_t(ws1_act_ref[...], act_ref[...])
           + dot_t(ws1_hid_ref[...], hidn_ref[...])
           + jnp.dot(ws1_id_ref[...], onehot, preferred_element_type=f32)
           + bs1_ref[...])

    ln_w = lnw_ref[...]          # [hid, 1], shared between x and act_rep
    ln_b = lnb_ref[...]

    def ln_relu(v):
        # LayerNorm over the feature (sublane) axis; two-pass centered
        # variance is numerically safer than E[x^2]-mu^2 and ~free at hid=32.
        mu = jnp.mean(v, axis=0, keepdims=True)
        d = v - mu
        var = jnp.mean(d * d, axis=0, keepdims=True)
        y = d * jax.lax.rsqrt(var + EPS) * ln_w + ln_b
        return jnp.maximum(y, 0.0)

    x = ln_relu(pre[0:hid])                     # relu(LN(obs_enc(inputs)))^T
    a = ln_relu(pre[hid:2 * hid])               # relu(LN([act_enc|id_emb]))^T

    # fc1: stacked K=2*hid matmul on [x; a] (sublane concat at a multiple of 8
    # is free), plus the already-computed hidden-state contribution.
    xa = jnp.concatenate([x, a], axis=0).astype(wfc1_ref.dtype)
    h = jnp.dot(wfc1_ref[...], xa, preferred_element_type=f32)
    h = jnp.maximum(h + pre[2 * hid:3 * hid] + b1_ref[...], 0.0)

    # fc2 -> feature-major output [action_dim, bt]
    out = jnp.dot(wfc2_ref[...], h.astype(wfc2_ref.dtype),
                  preferred_element_type=f32) + b2_ref[...]
    out_ref[...] = out.astype(out_ref.dtype)


# --------------------------------------------------------------------------- #
# Wrapper
# --------------------------------------------------------------------------- #
def mlp_agent_forward(inputs, actions, ids, hidden_state, packed, *,
                      obs_dim, action_dim, agent_num, hid_size,
                      b_tile=1024, compute_dtype=jnp.bfloat16):
    """`packed` is the f32 dict from pack_params.  Matmul operands are cast to
    `compute_dtype` (bf16 halves HBM traffic; accumulation stays f32)."""
    B = inputs.shape[0]
    hid = hid_size
    cdt = compute_dtype

    # Batch tile: multiple of 128 (lane-dense stores), as large as practical.
    bt = max(128, min(_round_up(b_tile, 128), _round_up(B, 128)))
    # Prefer >= 2 grid steps so the "parallel" axis can shard across both
    # v7x TensorCores.
    if _round_up(B, bt) == bt and bt >= 256:
        bt = _round_up(bt // 2, 128)
    b_pad = _round_up(B, bt)

    def prep(x):
        x = x.astype(cdt)
        if b_pad != B:           # pad only when needed (pick b_tile | B to avoid)
            x = jnp.pad(x, ((0, b_pad - B), (0, 0)))
        return x

    inp = prep(inputs)
    act = prep(actions)
    hidn = prep(hidden_state)
    ids_row = ids.astype(jnp.int32).reshape(1, -1)
    if b_pad != B:
        ids_row = jnp.pad(ids_row, ((0, 0), (0, b_pad - B)))

    ws1_obs = packed["ws1_obs"].astype(cdt)
    ws1_act = packed["ws1_act"].astype(cdt)
    ws1_id = packed["ws1_id"].astype(cdt)
    ws1_hid = packed["ws1_hid"].astype(cdt)
    wfc1 = packed["wfc1"].astype(cdt)
    wfc2 = packed["wfc2"].astype(cdt)
    bs1, b1c, b2c = packed["bs1"], packed["b1"], packed["b2"]      # f32
    lnw, lnb = packed["ln_w"], packed["ln_b"]                      # f32

    kernel = functools.partial(mlp_agent_kernel, hid=hid, agent_num=agent_num)
    resident = lambda i: (0, 0)   # constant index_map -> fetched once, VMEM-resident

    out_t = pl.pallas_call(
        kernel,
        out_shape=jax.ShapeDtypeStruct((action_dim, b_pad), jnp.float32),
        grid_spec=pltpu.PrefetchScalarGridSpec(
            num_scalar_prefetch=0,
            grid=(b_pad // bt,),
            in_specs=[
                pl.BlockSpec((bt, obs_dim), lambda i: (i, 0)),       # inputs
                pl.BlockSpec((bt, action_dim), lambda i: (i, 0)),    # actions
                pl.BlockSpec((bt, hid), lambda i: (i, 0)),           # hidden_state
                pl.BlockSpec((1, bt), lambda i: (0, i)),             # ids (lane-major)
                pl.BlockSpec((3 * hid, obs_dim), resident),          # ws1_obs
                pl.BlockSpec((3 * hid, action_dim), resident),       # ws1_act
                pl.BlockSpec((3 * hid, agent_num), resident),        # ws1_id
                pl.BlockSpec((3 * hid, hid), resident),              # ws1_hid
                pl.BlockSpec((3 * hid, 1), resident),                # bs1
                pl.BlockSpec((hid, 2 * hid), resident),              # wfc1
                pl.BlockSpec((hid, 1), resident),                    # b1
                pl.BlockSpec((action_dim, hid), resident),           # wfc2
                pl.BlockSpec((action_dim, 1), resident),             # b2
                pl.BlockSpec((hid, 1), resident),                    # ln_w
                pl.BlockSpec((hid, 1), resident),                    # ln_b
            ],
            out_specs=pl.BlockSpec((action_dim, bt), lambda i: (0, i)),
        ),
        compiler_params=pltpu.CompilerParams(
            dimension_semantics=("parallel",)),
    )(inp, act, hidn, ids_row,
      ws1_obs, ws1_act, ws1_id, ws1_hid, bs1,
      wfc1, b1c, wfc2, b2c, lnw, lnb)

    # Back to the module's [B, action_dim] convention (tiny transpose; the
    # kernel's own store was already lane-dense and unpadded on features).
    return out_t[:, :B].T


# --------------------------------------------------------------------------- #
# Parameter construction / packing
# --------------------------------------------------------------------------- #
def init_params(key, obs_dim, hid_size, id_dim, action_dim, agent_num):
    """Deterministic init mimicking PyTorch defaults (uniform +/- 1/sqrt(fan_in))."""
    ks = jax.random.split(key, 10)

    def lin(kw, kb, fan_in, fan_out):
        bound = 1.0 / jnp.sqrt(fan_in)
        w = jax.random.uniform(kw, (fan_in, fan_out), jnp.float32, -bound, bound)
        b = jax.random.uniform(kb, (1, fan_out), jnp.float32, -bound, bound)
        return w, b

    w_obs, b_obs = lin(ks[0], ks[1], obs_dim, hid_size)
    w_act, b_act = lin(ks[2], ks[3], action_dim, hid_size - id_dim)
    emb = jax.random.normal(ks[4], (agent_num, id_dim), jnp.float32)
    w1, b1 = lin(ks[5], ks[6], hid_size * 3, hid_size)
    w2, b2 = lin(ks[7], ks[8], hid_size, action_dim)
    ln_w = jnp.ones((1, hid_size), jnp.float32)   # nn.LayerNorm default
    ln_b = jnp.zeros((1, hid_size), jnp.float32)
    return dict(w_obs=w_obs, b_obs=b_obs, w_act=w_act, b_act=b_act, emb=emb,
                w1=w1, b1=b1, w2=w2, b2=b2, ln_w=ln_w, ln_b=ln_b)


def pack_params(params, *, obs_dim, action_dim, agent_num, hid_size, id_dim):
    """Feature-major ([out_features, K]) weight slabs for the fused kernel."""
    hid = hid_size
    f32 = jnp.float32

    def T(w):
        return jnp.asarray(w, f32).T

    # Fused stage-1 weights: rows 0:hid -> obs_enc, hid:2*hid -> [act_enc|id_emb],
    # 2*hid:3*hid -> fc1's hidden_state block.
    ws1_obs = jnp.zeros((3 * hid, obs_dim), f32).at[0:hid].set(T(params["w_obs"]))
    ws1_act = jnp.zeros((3 * hid, action_dim), f32).at[
        hid:hid + (hid - id_dim)].set(T(params["w_act"]))
    ws1_id = jnp.zeros((3 * hid, agent_num), f32).at[
        hid + (hid - id_dim):2 * hid].set(T(params["emb"]))
    ws1_hid = jnp.zeros((3 * hid, hid), f32).at[
        2 * hid:3 * hid].set(T(params["w1"][2 * hid:3 * hid]))

    bs1 = jnp.zeros((3 * hid, 1), f32)
    bs1 = bs1.at[0:hid, 0].set(params["b_obs"][0])
    bs1 = bs1.at[hid:hid + (hid - id_dim), 0].set(params["b_act"][0])

    wfc1 = jnp.concatenate([T(params["w1"][0:hid]),
                            T(params["w1"][hid:2 * hid])], axis=1)  # [hid, 2*hid]
    wfc2 = T(params["w2"])                                          # [act, hid]

    return dict(ws1_obs=ws1_obs, ws1_act=ws1_act, ws1_id=ws1_id, ws1_hid=ws1_hid,
                bs1=bs1, wfc1=wfc1, b1=T(params["b1"]), wfc2=wfc2,
                b2=T(params["b2"]), ln_w=T(params["ln_w"]), ln_b=T(params["ln_b"]))


# --------------------------------------------------------------------------- #
# Pure-JAX reference (mirrors the PyTorch module)
# --------------------------------------------------------------------------- #
def reference_forward(inputs, actions, ids, hidden_state, params):
    def ln(v):
        mu = jnp.mean(v, -1, keepdims=True)
        var = jnp.mean((v - mu) ** 2, -1, keepdims=True)
        return (v - mu) / jnp.sqrt(var + EPS) * params["ln_w"] + params["ln_b"]

    x = jax.nn.relu(ln(inputs @ params["w_obs"] + params["b_obs"]))
    act_rep = jnp.concatenate(
        [actions @ params["w_act"] + params["b_act"], params["emb"][ids]], axis=-1)
    act_rep = jax.nn.relu(ln(act_rep))
    h = jax.nn.relu(
        jnp.concatenate([x, act_rep, hidden_state], -1) @ params["w1"] + params["b1"])
    return h @ params["w2"] + params["b2"]


if __name__ == "__main__":
    B, OBS, HID, ID_DIM, ACT, NAGENT = 8, 24, 32, 16, 8, 4

    key = jax.random.PRNGKey(0)
    kp, ki, ka, kd, kh = jax.random.split(key, 5)

    params = init_params(kp, OBS, HID, ID_DIM, ACT, NAGENT)
    packed = pack_params(params, obs_dim=OBS, action_dim=ACT, agent_num=NAGENT,
                         hid_size=HID, id_dim=ID_DIM)

    inputs = jax.random.normal(ki, (B, OBS), jnp.float32)
    actions = jax.random.normal(ka, (B, ACT), jnp.float32)
    ids = jax.random.randint(kd, (B,), 0, NAGENT, jnp.int32)
    hidden_state = jax.random.normal(kh, (B, HID), jnp.float32)

    ref = reference_forward(inputs, actions, ids, hidden_state, params)

    # 1) f32 operands: tight correctness check of packing / fusion / layout.
    out_f32 = mlp_agent_forward(inputs, actions, ids, hidden_state, packed,
                                obs_dim=OBS, action_dim=ACT, agent_num=NAGENT,
                                hid_size=HID, compute_dtype=jnp.float32)
    out_f32 = jax.block_until_ready(out_f32)
    assert out_f32.shape == (B, ACT)
    assert jnp.allclose(out_f32, ref, atol=2e-3, rtol=2e-3), "f32 kernel mismatch"

    # 2) bf16 matmul operands (the performance configuration): loose check
    #    (bf16 operand rounding only; accumulation and LN stay f32).
    out_bf16 = mlp_agent_forward(inputs, actions, ids, hidden_state, packed,
                                 obs_dim=OBS, action_dim=ACT, agent_num=NAGENT,
                                 hid_size=HID, compute_dtype=jnp.bfloat16)
    out_bf16 = jax.block_until_ready(out_bf16)
    assert out_bf16.shape == (B, ACT)
    assert jnp.allclose(out_bf16, ref, atol=1e-1, rtol=1e-1), "bf16 kernel mismatch"

    print("KERNEL_OK")
</pallas_src>

<mosaic_0001>
module attributes {stable_mosaic.version = 11 : i64} {
  func.func @mlp_agent_kernel(%arg0: i32, %arg1: memref<128x24xf32, #tpu.memory_space<vmem>>, %arg2: memref<128x8xf32, #tpu.memory_space<vmem>>, %arg3: memref<128x32xf32, #tpu.memory_space<vmem>>, %arg4: memref<1x128xi32, #tpu.memory_space<vmem>>, %arg5: memref<96x24xf32, #tpu.memory_space<vmem>>, %arg6: memref<96x8xf32, #tpu.memory_space<vmem>>, %arg7: memref<96x4xf32, #tpu.memory_space<vmem>>, %arg8: memref<96x32xf32, #tpu.memory_space<vmem>>, %arg9: memref<96x1xf32, #tpu.memory_space<vmem>>, %arg10: memref<32x64xf32, #tpu.memory_space<vmem>>, %arg11: memref<32x1xf32, #tpu.memory_space<vmem>>, %arg12: memref<8x32xf32, #tpu.memory_space<vmem>>, %arg13: memref<8x1xf32, #tpu.memory_space<vmem>>, %arg14: memref<32x1xf32, #tpu.memory_space<vmem>>, %arg15: memref<32x1xf32, #tpu.memory_space<vmem>>, %arg16: memref<8x128xf32, #tpu.memory_space<vmem>>) attributes {dimension_semantics = [#tpu.dimension_semantics<parallel>], iteration_bounds = array<i64: 1>, scalar_prefetch = 0 : i64, scratch_operands = 0 : i64, tpu.core_type = #tpu.core_type<tc>, window_params = [{transform_indices = @transform_0, window_bounds = array<i64: 128, 24>}, {transform_indices = @transform_1, window_bounds = array<i64: 128, 8>}, {transform_indices = @transform_2, window_bounds = array<i64: 128, 32>}, {transform_indices = @transform_3, window_bounds = array<i64: 1, 128>}, {pipeline_mode = #tpu.pipeline_mode<synchronous>, transform_indices = @transform_4, window_bounds = array<i64: 96, 24>}, {pipeline_mode = #tpu.pipeline_mode<synchronous>, transform_indices = @transform_5, window_bounds = array<i64: 96, 8>}, {pipeline_mode = #tpu.pipeline_mode<synchronous>, transform_indices = @transform_6, window_bounds = array<i64: 96, 4>}, {pipeline_mode = #tpu.pipeline_mode<synchronous>, transform_indices = @transform_7, window_bounds = array<i64: 96, 32>}, {pipeline_mode = #tpu.pipeline_mode<synchronous>, transform_indices = @transform_8, window_bounds = array<i64: 96, 1>}, {pipeline_mode = #tpu.pipeline_mode<synchronous>, transform_indices = @transform_9, window_bounds = array<i64: 32, 64>}, {pipeline_mode = #tpu.pipeline_mode<synchronous>, transform_indices = @transform_10, window_bounds = array<i64: 32, 1>}, {pipeline_mode = #tpu.pipeline_mode<synchronous>, transform_indices = @transform_11, window_bounds = array<i64: 8, 32>}, {pipeline_mode = #tpu.pipeline_mode<synchronous>, transform_indices = @transform_12, window_bounds = array<i64: 8, 1>}, {pipeline_mode = #tpu.pipeline_mode<synchronous>, transform_indices = @transform_13, window_bounds = array<i64: 32, 1>}, {pipeline_mode = #tpu.pipeline_mode<synchronous>, transform_indices = @transform_14, window_bounds = array<i64: 32, 1>}, {transform_indices = @transform_15, window_bounds = array<i64: 8, 128>}]} {
    %0 = tpu.iota {dimensions = array<i32: 0>} : vector<4x128xi32>
    %c0 = arith.constant 0 : index
    %c0_0 = arith.constant 0 : index
    %1 = vector.load %arg4[%c0, %c0_0] : memref<1x128xi32, #tpu.memory_space<vmem>>, vector<1x128xi32>
    %2 = vector.broadcast %1 : vector<1x128xi32> to vector<4x128xi32>
    %3 = arith.cmpi eq, %0, %2 : vector<4x128xi32>
    %4 = arith.extui %3 : vector<4x128xi1> to vector<4x128xi32>
    %5 = arith.sitofp %4 : vector<4x128xi32> to vector<4x128xf32>
    %c0_1 = arith.constant 0 : index
    %c0_2 = arith.constant 0 : index
    %6 = vector.load %arg5[%c0_1, %c0_2] : memref<96x24xf32, #tpu.memory_space<vmem>>, vector<96x24xf32>
    %c0_3 = arith.constant 0 : index
    %c0_4 = arith.constant 0 : index
    %7 = vector.load %arg1[%c0_3, %c0_4] : memref<128x24xf32, #tpu.memory_space<vmem>>, vector<128x24xf32>
    %cst = arith.constant dense<0.000000e+00> : vector<96x128xf32>
    %8 = tpu.matmul %6, %7, %cst {dimension_numbers = #tpu.dot_dimension_numbers<[1], [1], [0], [0], [0, 0, 1, 0], [], []>} : vector<96x24xf32>, vector<128x24xf32>, vector<96x128xf32> -> vector<96x128xf32>
    %c0_5 = arith.constant 0 : index
    %c0_6 = arith.constant 0 : index
    %9 = vector.load %arg6[%c0_5, %c0_6] : memref<96x8xf32, #tpu.memory_space<vmem>>, vector<96x8xf32>
    %c0_7 = arith.constant 0 : index
    %c0_8 = arith.constant 0 : index
    %10 = vector.load %arg2[%c0_7, %c0_8] : memref<128x8xf32, #tpu.memory_space<vmem>>, vector<128x8xf32>
    %cst_9 = arith.constant dense<0.000000e+00> : vector<96x128xf32>
    %11 = tpu.matmul %9, %10, %cst_9 {dimension_numbers = #tpu.dot_dimension_numbers<[1], [1], [0], [0], [0, 0, 1, 0], [], []>} : vector<96x8xf32>, vector<128x8xf32>, vector<96x128xf32> -> vector<96x128xf32>
    %12 = arith.addf %8, %11 : vector<96x128xf32>
    %c0_10 = arith.constant 0 : index
    %c0_11 = arith.constant 0 : index
    %13 = vector.load %arg8[%c0_10, %c0_11] : memref<96x32xf32, #tpu.memory_space<vmem>>, vector<96x32xf32>
    %c0_12 = arith.constant 0 : index
    %c0_13 = arith.constant 0 : index
    %14 = vector.load %arg3[%c0_12, %c0_13] : memref<128x32xf32, #tpu.memory_space<vmem>>, vector<128x32xf32>
    %cst_14 = arith.constant dense<0.000000e+00> : vector<96x128xf32>
    %15 = tpu.matmul %13, %14, %cst_14 {dimension_numbers = #tpu.dot_dimension_numbers<[1], [1], [0], [0], [0, 0, 1, 0], [], []>} : vector<96x32xf32>, vector<128x32xf32>, vector<96x128xf32> -> vector<96x128xf32>
    %16 = arith.addf %12, %15 : vector<96x128xf32>
    %c0_15 = arith.constant 0 : index
    %c0_16 = arith.constant 0 : index
    %17 = vector.load %arg7[%c0_15, %c0_16] : memref<96x4xf32, #tpu.memory_space<vmem>>, vector<96x4xf32>
    %cst_17 = arith.constant dense<0.000000e+00> : vector<96x128xf32>
    %18 = tpu.matmul %17, %5, %cst_17 {dimension_numbers = #tpu.dot_dimension_numbers<[1], [0], [0], [1], [0, 0, 1, 1], [], []>} : vector<96x4xf32>, vector<4x128xf32>, vector<96x128xf32> -> vector<96x128xf32>
    %19 = arith.addf %16, %18 : vector<96x128xf32>
    %c0_18 = arith.constant 0 : index
    %c0_19 = arith.constant 0 : index
    %20 = vector.load %arg9[%c0_18, %c0_19] : memref<96x1xf32, #tpu.memory_space<vmem>>, vector<96x1xf32>
    %21 = vector.broadcast %20 : vector<96x1xf32> to vector<96x128xf32>
    %22 = arith.addf %19, %21 : vector<96x128xf32>
    %c0_20 = arith.constant 0 : index
    %c0_21 = arith.constant 0 : index
    %23 = vector.load %arg14[%c0_20, %c0_21] : memref<32x1xf32, #tpu.memory_space<vmem>>, vector<32x1xf32>
    %c0_22 = arith.constant 0 : index
    %c0_23 = arith.constant 0 : index
    %24 = vector.load %arg15[%c0_22, %c0_23] : memref<32x1xf32, #tpu.memory_space<vmem>>, vector<32x1xf32>
    %25 = vector.extract_strided_slice %22 {offsets = [0, 0], sizes = [32, 128], strides = [1, 1]} : vector<96x128xf32> to vector<32x128xf32>
    %cst_24 = arith.constant dense<0.000000e+00> : vector<128xf32>
    %26 = vector.multi_reduction <add>, %25, %cst_24 [0] : vector<32x128xf32> to vector<128xf32>
    %27 = vector.shape_cast %26 : vector<128xf32> to vector<1x128xf32>
    %cst_25 = arith.constant 3.200000e+01 : f32
    %28 = vector.broadcast %cst_25 : f32 to vector<1x128xf32>
    %29 = arith.divf %27, %28 : vector<1x128xf32>
    %30 = vector.broadcast %29 : vector<1x128xf32> to vector<32x128xf32>
    %31 = arith.subf %25, %30 : vector<32x128xf32>
    %32 = arith.mulf %31, %31 : vector<32x128xf32>
    %cst_26 = arith.constant dense<0.000000e+00> : vector<128xf32>
    %33 = vector.multi_reduction <add>, %32, %cst_26 [0] : vector<32x128xf32> to vector<128xf32>
    %34 = vector.shape_cast %33 : vector<128xf32> to vector<1x128xf32>
    %cst_27 = arith.constant 3.200000e+01 : f32
    %35 = vector.broadcast %cst_27 : f32 to vector<1x128xf32>
    %36 = arith.divf %34, %35 : vector<1x128xf32>
    %cst_28 = arith.constant 9.99999974E-6 : f32
    %37 = vector.broadcast %cst_28 : f32 to vector<1x128xf32>
    %38 = arith.addf %36, %37 : vector<1x128xf32>
    %39 = math.rsqrt %38 : vector<1x128xf32>
    %40 = vector.broadcast %39 : vector<1x128xf32> to vector<32x128xf32>
    %41 = arith.mulf %31, %40 : vector<32x128xf32>
    %42 = vector.broadcast %23 : vector<32x1xf32> to vector<32x128xf32>
    %43 = arith.mulf %41, %42 : vector<32x128xf32>
    %44 = vector.broadcast %24 : vector<32x1xf32> to vector<32x128xf32>
    %45 = arith.addf %43, %44 : vector<32x128xf32>
    %cst_29 = arith.constant 0.000000e+00 : f32
    %46 = vector.broadcast %cst_29 : f32 to vector<32x128xf32>
    %47 = arith.maximumf %45, %46 : vector<32x128xf32>
    %48 = vector.extract_strided_slice %22 {offsets = [32, 0], sizes = [32, 128], strides = [1, 1]} : vector<96x128xf32> to vector<32x128xf32>
    %cst_30 = arith.constant dense<0.000000e+00> : vector<128xf32>
    %49 = vector.multi_reduction <add>, %48, %cst_30 [0] : vector<32x128xf32> to vector<128xf32>
    %50 = vector.shape_cast %49 : vector<128xf32> to vector<1x128xf32>
    %cst_31 = arith.constant 3.200000e+01 : f32
    %51 = vector.broadcast %cst_31 : f32 to vector<1x128xf32>
    %52 = arith.divf %50, %51 : vector<1x128xf32>
    %53 = vector.broadcast %52 : vector<1x128xf32> to vector<32x128xf32>
    %54 = arith.subf %48, %53 : vector<32x128xf32>
    %55 = arith.mulf %54, %54 : vector<32x128xf32>
    %cst_32 = arith.constant dense<0.000000e+00> : vector<128xf32>
    %56 = vector.multi_reduction <add>, %55, %cst_32 [0] : vector<32x128xf32> to vector<128xf32>
    %57 = vector.shape_cast %56 : vector<128xf32> to vector<1x128xf32>
    %cst_33 = arith.constant 3.200000e+01 : f32
    %58 = vector.broadcast %cst_33 : f32 to vector<1x128xf32>
    %59 = arith.divf %57, %58 : vector<1x128xf32>
    %cst_34 = arith.constant 9.99999974E-6 : f32
    %60 = vector.broadcast %cst_34 : f32 to vector<1x128xf32>
    %61 = arith.addf %59, %60 : vector<1x128xf32>
    %62 = math.rsqrt %61 : vector<1x128xf32>
    %63 = vector.broadcast %62 : vector<1x128xf32> to vector<32x128xf32>
    %64 = arith.mulf %54, %63 : vector<32x128xf32>
    %65 = vector.broadcast %23 : vector<32x1xf32> to vector<32x128xf32>
    %66 = arith.mulf %64, %65 : vector<32x128xf32>
    %67 = vector.broadcast %24 : vector<32x1xf32> to vector<32x128xf32>
    %68 = arith.addf %66, %67 : vector<32x128xf32>
    %cst_35 = arith.constant 0.000000e+00 : f32
    %69 = vector.broadcast %cst_35 : f32 to vector<32x128xf32>
    %70 = arith.maximumf %68, %69 : vector<32x128xf32>
    %71 = tpu.concatenate %47, %70 in 0 : vector<32x128xf32>, vector<32x128xf32> -> vector<64x128xf32>
    %c0_36 = arith.constant 0 : index
    %c0_37 = arith.constant 0 : index
    %72 = vector.load %arg10[%c0_36, %c0_37] : memref<32x64xf32, #tpu.memory_space<vmem>>, vector<32x64xf32>
    %cst_38 = arith.constant dense<0.000000e+00> : vector<32x128xf32>
    %73 = tpu.matmul %72, %71, %cst_38 {dimension_numbers = #tpu.dot_dimension_numbers<[1], [0], [0], [1], [0, 0, 1, 1], [], []>} : vector<32x64xf32>, vector<64x128xf32>, vector<32x128xf32> -> vector<32x128xf32>
    %74 = vector.extract_strided_slice %22 {offsets = [64, 0], sizes = [32, 128], strides = [1, 1]} : vector<96x128xf32> to vector<32x128xf32>
    %75 = arith.addf %73, %74 : vector<32x128xf32>
    %c0_39 = arith.constant 0 : index
    %c0_40 = arith.constant 0 : index
    %76 = vector.load %arg11[%c0_39, %c0_40] : memref<32x1xf32, #tpu.memory_space<vmem>>, vector<32x1xf32>
    %77 = vector.broadcast %76 : vector<32x1xf32> to vector<32x128xf32>
    %78 = arith.addf %75, %77 : vector<32x128xf32>
    %cst_41 = arith.constant 0.000000e+00 : f32
    %79 = vector.broadcast %cst_41 : f32 to vector<32x128xf32>
    %80 = arith.maximumf %78, %79 : vector<32x128xf32>
    %c0_42 = arith.constant 0 : index
    %c0_43 = arith.constant 0 : index
    %81 = vector.load %arg12[%c0_42, %c0_43] : memref<8x32xf32, #tpu.memory_space<vmem>>, vector<8x32xf32>
    %cst_44 = arith.constant dense<0.000000e+00> : vector<8x128xf32>
    %82 = tpu.matmul %81, %80, %cst_44 {dimension_numbers = #tpu.dot_dimension_numbers<[1], [0], [0], [1], [0, 0, 1, 1], [], []>} : vector<8x32xf32>, vector<32x128xf32>, vector<8x128xf32> -> vector<8x128xf32>
    %c0_45 = arith.constant 0 : index
    %c0_46 = arith.constant 0 : index
    %83 = vector.load %arg13[%c0_45, %c0_46] : memref<8x1xf32, #tpu.memory_space<vmem>>, vector<8x1xf32>
    %84 = vector.broadcast %83 : vector<8x1xf32> to vector<8x128xf32>
    %85 = arith.addf %82, %84 : vector<8x128xf32>
    %c0_47 = arith.constant 0 : index
    %c0_48 = arith.constant 0 : index
    %86 = vector.load %arg16[%c0_47, %c0_48] : memref<8x128xf32, #tpu.memory_space<vmem>>, vector<8x128xf32>
    tpu.vector_store %arg16[%c0_47, %c0_48], %85 {strides = array<i32>} : memref<8x128xf32, #tpu.memory_space<vmem>>, vector<8x128xf32>,
    return
  }
  func.func @transform_0(%arg0: i32) -> (i32, i32) {
    %c0_i32 = arith.constant 0 : i32
    %c0_i32_0 = arith.constant 0 : i32
    return %arg0, %c0_i32 : i32, i32
  }
  func.func @transform_1(%arg0: i32) -> (i32, i32) {
    %c0_i32 = arith.constant 0 : i32
    %c0_i32_0 = arith.constant 0 : i32
    return %arg0, %c0_i32 : i32, i32
  }
  func.func @transform_2(%arg0: i32) -> (i32, i32) {
    %c0_i32 = arith.constant 0 : i32
    %c0_i32_0 = arith.constant 0 : i32
    return %arg0, %c0_i32 : i32, i32
  }
  func.func @transform_3(%arg0: i32) -> (i32, i32) {
    %c0_i32 = arith.constant 0 : i32
    %c0_i32_0 = arith.constant 0 : i32
    return %c0_i32, %arg0 : i32, i32
  }
  func.func @transform_4(%arg0: i32) -> (i32, i32) {
    %c0_i32 = arith.constant 0 : i32
    %c0_i32_0 = arith.constant 0 : i32
    %c0_i32_1 = arith.constant 0 : i32
    return %c0_i32, %c0_i32_0 : i32, i32
  }
  func.func @transform_5(%arg0: i32) -> (i32, i32) {
    %c0_i32 = arith.constant 0 : i32
    %c0_i32_0 = arith.constant 0 : i32
    %c0_i32_1 = arith.constant 0 : i32
    return %c0_i32, %c0_i32_0 : i32, i32
  }
  func.func @transform_6(%arg0: i32) -> (i32, i32) {
    %c0_i32 = arith.constant 0 : i32
    %c0_i32_0 = arith.constant 0 : i32
    %c0_i32_1 = arith.constant 0 : i32
    return %c0_i32, %c0_i32_0 : i32, i32
  }
  func.func @transform_7(%arg0: i32) -> (i32, i32) {
    %c0_i32 = arith.constant 0 : i32
    %c0_i32_0 = arith.constant 0 : i32
    %c0_i32_1 = arith.constant 0 : i32
    return %c0_i32, %c0_i32_0 : i32, i32
  }
  func.func @transform_8(%arg0: i32) -> (i32, i32) {
    %c0_i32 = arith.constant 0 : i32
    %c0_i32_0 = arith.constant 0 : i32
    %c0_i32_1 = arith.constant 0 : i32
    return %c0_i32, %c0_i32_0 : i32, i32
  }
  func.func @transform_9(%arg0: i32) -> (i32, i32) {
    %c0_i32 = arith.constant 0 : i32
    %c0_i32_0 = arith.constant 0 : i32
    %c0_i32_1 = arith.constant 0 : i32
    return %c0_i32, %c0_i32_0 : i32, i32
  }
  func.func @transform_10(%arg0: i32) -> (i32, i32) {
    %c0_i32 = arith.constant 0 : i32
    %c0_i32_0 = arith.constant 0 : i32
    %c0_i32_1 = arith.constant 0 : i32
    return %c0_i32, %c0_i32_0 : i32, i32
  }
  func.func @transform_11(%arg0: i32) -> (i32, i32) {
    %c0_i32 = arith.constant 0 : i32
    %c0_i32_0 = arith.constant 0 : i32
    %c0_i32_1 = arith.constant 0 : i32
    return %c0_i32, %c0_i32_0 : i32, i32
  }
  func.func @transform_12(%arg0: i32) -> (i32, i32) {
    %c0_i32 = arith.constant 0 : i32
    %c0_i32_0 = arith.constant 0 : i32
    %c0_i32_1 = arith.constant 0 : i32
    return %c0_i32, %c0_i32_0 : i32, i32
  }
  func.func @transform_13(%arg0: i32) -> (i32, i32) {
    %c0_i32 = arith.constant 0 : i32
    %c0_i32_0 = arith.constant 0 : i32
    %c0_i32_1 = arith.constant 0 : i32
    return %c0_i32, %c0_i32_0 : i32, i32
  }
  func.func @transform_14(%arg0: i32) -> (i32, i32) {
    %c0_i32 = arith.constant 0 : i32
    %c0_i32_0 = arith.constant 0 : i32
    %c0_i32_1 = arith.constant 0 : i32
    return %c0_i32, %c0_i32_0 : i32, i32
  }
  func.func @transform_15(%arg0: i32) -> (i32, i32) {
    %c0_i32 = arith.constant 0 : i32
    %c0_i32_0 = arith.constant 0 : i32
    return %c0_i32, %arg0 : i32, i32
  }
}

</mosaic_0001>

<llo_original>
// kernel: tpu_custom_call.1
$region0: #{tpu_custom_call.1}
  #allocation0 [shape = 'u32[]', space=smem, size = 0x4, offset = 0x4, fixed_abs, tag = 'smem constant byte address 0x4 - core index']
  #allocation1 [shape = 'u32[72,128]{1,0:T(1,128)}', space=vmem, size = 0x9000, scoped, tag = 'internal scratch']
  %s0 = inlined_call_operand.vmem [shape: f32[128,24], index: 0, kind: input, shape index: {}]
  %s1 = inlined_call_operand.vmem [shape: f32[128,8], index: 1, kind: input, shape index: {}]
  %s2 = inlined_call_operand.vmem [shape: f32[128,32], index: 2, kind: input, shape index: {}]
  %s3 = inlined_call_operand.vmem [shape: s32[1,128], index: 3, kind: input, shape index: {}]
  %s4 = inlined_call_operand.vmem [shape: f32[96,24], index: 4, kind: input, shape index: {}]
  %s5 = inlined_call_operand.vmem [shape: f32[96,8], index: 5, kind: input, shape index: {}]
  %s6 = inlined_call_operand.vmem [shape: f32[96,4], index: 6, kind: input, shape index: {}]
  %s7 = inlined_call_operand.vmem [shape: f32[96,32], index: 7, kind: input, shape index: {}]
  %s8 = inlined_call_operand.vmem [shape: f32[96,1], index: 8, kind: input, shape index: {}]
  %s9 = inlined_call_operand.vmem [shape: f32[32,64], index: 9, kind: input, shape index: {}]
  %s10 = inlined_call_operand.vmem [shape: f32[32,1], index: 10, kind: input, shape index: {}]
  %s11 = inlined_call_operand.vmem [shape: f32[8,32], index: 11, kind: input, shape index: {}]
  %s12 = inlined_call_operand.vmem [shape: f32[8,1], index: 12, kind: input, shape index: {}]
  %s13 = inlined_call_operand.vmem [shape: f32[32,1], index: 13, kind: input, shape index: {}]
  %s14 = inlined_call_operand.vmem [shape: f32[32,1], index: 14, kind: input, shape index: {}]
  %s15 = inlined_call_operand.hbm [shape: f32[8,128], index: 15, kind: output, shape index: {}]
  %s16 = sld [smem:[#allocation0]]
  $region70: #{tpu_custom_call.1} parent=0
    _
  %s18 = ssub.s32 1, %s16
  %s19 = scalar_select 0, %s18, %s16
  $region1: #{tpu_custom_call.1} parent=0
    #allocation2 [shape = 'u8[4096]{0}', space=vmem, size = 0x1000, scoped, tag = 'output window, operand 0, single buffered']
    #allocation3 [shape = 's32[1]{0}', space=sflag, size = 0x4, scoped, tag = 'scoped memory for tpu_custom_call.1']
    %20 = vsyncpa [#allocation3], 0
    // Predicated region
    $region2: #{tpu_custom_call.1} parent=1 // pred_check
      _
    $region3: #{tpu_custom_call.1} parent=1 // pred_check_branch
      %22 = sbr.rel (0) target = $region5
    $region4: #{tpu_custom_call.1} parent=1 // pred_region
      _
    $region5: #{tpu_custom_call.1} parent=1 // pred_fallthru
      _
    // Predicated region
    $region6: #{tpu_custom_call.1} parent=1 // pred_check
      _
    $region7: #{tpu_custom_call.1} parent=1 // pred_check_branch
      %24 = sbr.rel (0) target = $region9
    $region8: #{tpu_custom_call.1} parent=1 // pred_region
      _
    $region9: #{tpu_custom_call.1} parent=1 // pred_fallthru
      _
    // Predicated region
    $region10: #{tpu_custom_call.1} parent=1 // pred_check
      _
    $region11: #{tpu_custom_call.1} parent=1 // pred_check_branch
      %26 = sbr.rel (0) target = $region13
    $region12: #{tpu_custom_call.1} parent=1 // pred_region
      _
    $region13: #{tpu_custom_call.1} parent=1 // pred_fallthru
      _
    // Predicated region
    $region14: #{tpu_custom_call.1} parent=1 // pred_check
      _
    $region15: #{tpu_custom_call.1} parent=1 // pred_check_branch
      %28 = sbr.rel (0) target = $region17
    $region16: #{tpu_custom_call.1} parent=1 // pred_region
      _
    $region17: #{tpu_custom_call.1} parent=1 // pred_fallthru
      _
    // Predicated region
    $region18: #{tpu_custom_call.1} parent=1 // pred_check
      _
    $region19: #{tpu_custom_call.1} parent=1 // pred_check_branch
      %30 = sbr.rel (0) target = $region21
    $region20: #{tpu_custom_call.1} parent=1 // pred_region
      _
    $region21: #{tpu_custom_call.1} parent=1 // pred_fallthru
      _
    // Predicated region
    $region22: #{tpu_custom_call.1} parent=1 // pred_check
      _
    $region23: #{tpu_custom_call.1} parent=1 // pred_check_branch
      %32 = sbr.rel (0) target = $region25
    $region24: #{tpu_custom_call.1} parent=1 // pred_region
      _
    $region25: #{tpu_custom_call.1} parent=1 // pred_fallthru
      _
    // Predicated region
    $region26: #{tpu_custom_call.1} parent=1 // pred_check
      _
    $region27: #{tpu_custom_call.1} parent=1 // pred_check_branch
      %34 = sbr.rel (0) target = $region29
    $region28: #{tpu_custom_call.1} parent=1 // pred_region
      _
    $region29: #{tpu_custom_call.1} parent=1 // pred_fallthru
      _
    // Predicated region
    $region30: #{tpu_custom_call.1} parent=1 // pred_check
      _
    $region31: #{tpu_custom_call.1} parent=1 // pred_check_branch
      %36 = sbr.rel (0) target = $region33
    $region32: #{tpu_custom_call.1} parent=1 // pred_region
      _
    $region33: #{tpu_custom_call.1} parent=1 // pred_fallthru
      _
    // Predicated region
    $region34: #{tpu_custom_call.1} parent=1 // pred_check
      _
    $region35: #{tpu_custom_call.1} parent=1 // pred_check_branch
      %38 = sbr.rel (0) target = $region37
    $region36: #{tpu_custom_call.1} parent=1 // pred_region
      _
    $region37: #{tpu_custom_call.1} parent=1 // pred_fallthru
      _
    // Predicated region
    $region38: #{tpu_custom_call.1} parent=1 // pred_check
      _
    $region39: #{tpu_custom_call.1} parent=1 // pred_check_branch
      %40 = sbr.rel (0) target = $region41
    $region40: #{tpu_custom_call.1} parent=1 // pred_region
      _
    $region41: #{tpu_custom_call.1} parent=1 // pred_fallthru
      _
    // Predicated region
    $region42: #{tpu_custom_call.1} parent=1 // pred_check
      _
    $region43: #{tpu_custom_call.1} parent=1 // pred_check_branch
      %42 = sbr.rel (0) target = $region45
    $region44: #{tpu_custom_call.1} parent=1 // pred_region
      _
    $region45: #{tpu_custom_call.1} parent=1 // pred_fallthru
      _
    // Predicated region
    $region46: #{tpu_custom_call.1} parent=1 // pred_check
      _
    $region47: #{tpu_custom_call.1} parent=1 // pred_check_branch
      %44 = sbr.rel (0) target = $region49
    $region48: #{tpu_custom_call.1} parent=1 // pred_region
      _
    $region49: #{tpu_custom_call.1} parent=1 // pred_fallthru
      _
    // Predicated region
    $region50: #{tpu_custom_call.1} parent=1 // pred_check
      _
    $region51: #{tpu_custom_call.1} parent=1 // pred_check_branch
      %46 = sbr.rel (0) target = $region53
    $region52: #{tpu_custom_call.1} parent=1 // pred_region
      _
    $region53: #{tpu_custom_call.1} parent=1 // pred_fallthru
      _
    // Predicated region
    $region54: #{tpu_custom_call.1} parent=1 // pred_check
      _
    $region55: #{tpu_custom_call.1} parent=1 // pred_check_branch
      %48 = sbr.rel (0) target = $region57
    $region56: #{tpu_custom_call.1} parent=1 // pred_region
      _
    $region57: #{tpu_custom_call.1} parent=1 // pred_fallthru
      _
    // Predicated region
    $region58: #{tpu_custom_call.1} parent=1 // pred_check
      _
    $region59: #{tpu_custom_call.1} parent=1 // pred_check_branch
      %50 = sbr.rel (0) target = $region61
    $region60: #{tpu_custom_call.1} parent=1 // pred_region
      _
    $region61: #{tpu_custom_call.1} parent=1 // pred_fallthru
      _
    %v51 = vlaneseq
    %v52 = vshrl.u32 %v51, 7
    %v53 = vld [vmem:[%s3] sm:$0x1]
    %v54 = vperm.slane %v53, 0
    %vm55 = vcmp.eq.s32.totalorder %v52, %v54
    %v56 = vsel %vm55, 1, 0
    %v57 = vcvt.s32.f32 %v56
    %v58 = vld [vmem:[%s4] sm:$0xff]
    %v59 = vld [vmem:[%s4 + $0x8] sm:$0xff]
    %v60 = vld [vmem:[%s4 + $0x10] sm:$0xff]
    %v61 = vld [vmem:[%s4 + $0x18] sm:$0xff]
    %v62 = vld [vmem:[%s4 + $0x20] sm:$0xff]
    %v63 = vld [vmem:[%s4 + $0x28] sm:$0xff]
    %v64 = vld [vmem:[%s4 + $0x30] sm:$0xff]
    %v65 = vld [vmem:[%s4 + $0x38] sm:$0xff]
    %v66 = vld [vmem:[%s4 + $0x40] sm:$0xff]
    %v67 = vld [vmem:[%s4 + $0x48] sm:$0xff]
    %v68 = vld [vmem:[%s4 + $0x50] sm:$0xff]
    %v69 = vld [vmem:[%s4 + $0x58] sm:$0xff]
    %v70 = vld [vmem:[%s0] sm:$0xff]
    %v71 = vld [vmem:[%s0 + $0x8] sm:$0xff]
    %v72 = vld [vmem:[%s0 + $0x10] sm:$0xff]
    %v73 = vld [vmem:[%s0 + $0x18] sm:$0xff]
    %v74 = vld [vmem:[%s0 + $0x20] sm:$0xff]
    %v75 = vld [vmem:[%s0 + $0x28] sm:$0xff]
    %v76 = vld [vmem:[%s0 + $0x30] sm:$0xff]
    %v77 = vld [vmem:[%s0 + $0x38] sm:$0xff]
    %v78 = vld [vmem:[%s0 + $0x40] sm:$0xff]
    %v79 = vld [vmem:[%s0 + $0x48] sm:$0xff]
    %v80 = vld [vmem:[%s0 + $0x50] sm:$0xff]
    %v81 = vld [vmem:[%s0 + $0x58] sm:$0xff]
    %v82 = vld [vmem:[%s0 + $0x60] sm:$0xff]
    %v83 = vld [vmem:[%s0 + $0x68] sm:$0xff]
    %v84 = vld [vmem:[%s0 + $0x70] sm:$0xff]
    %v85 = vld [vmem:[%s0 + $0x78] sm:$0xff]
    %v86 = vld [vmem:[%s5] sm:$0xff]
    %v87 = vld [vmem:[%s5 + $0x8] sm:$0xff]
    %v88 = vld [vmem:[%s5 + $0x10] sm:$0xff]
    %v89 = vld [vmem:[%s5 + $0x18] sm:$0xff]
    %v90 = vld [vmem:[%s5 + $0x20] sm:$0xff]
    %v91 = vld [vmem:[%s5 + $0x28] sm:$0xff]
    %v92 = vld [vmem:[%s5 + $0x30] sm:$0xff]
    %v93 = vld [vmem:[%s5 + $0x38] sm:$0xff]
    %v94 = vld [vmem:[%s5 + $0x40] sm:$0xff]
    %v95 = vld [vmem:[%s5 + $0x48] sm:$0xff]
    %v96 = vld [vmem:[%s5 + $0x50] sm:$0xff]
    %v97 = vld [vmem:[%s5 + $0x58] sm:$0xff]
    %v98 = vld [vmem:[%s1] sm:$0xff]
    %v99 = vld [vmem:[%s1 + $0x8] sm:$0xff]
    %v100 = vld [vmem:[%s1 + $0x10] sm:$0xff]
    %v101 = vld [vmem:[%s1 + $0x18] sm:$0xff]
    %v102 = vld [vmem:[%s1 + $0x20] sm:$0xff]
    %v103 = vld [vmem:[%s1 + $0x28] sm:$0xff]
    %v104 = vld [vmem:[%s1 + $0x30] sm:$0xff]
    %v105 = vld [vmem:[%s1 + $0x38] sm:$0xff]
    %v106 = vld [vmem:[%s1 + $0x40] sm:$0xff]
    %v107 = vld [vmem:[%s1 + $0x48] sm:$0xff]
    %v108 = vld [vmem:[%s1 + $0x50] sm:$0xff]
    %v109 = vld [vmem:[%s1 + $0x58] sm:$0xff]
    %v110 = vld [vmem:[%s1 + $0x60] sm:$0xff]
    %v111 = vld [vmem:[%s1 + $0x68] sm:$0xff]
    %v112 = vld [vmem:[%s1 + $0x70] sm:$0xff]
    %v113 = vld [vmem:[%s1 + $0x78] sm:$0xff]
    %vm114 = vcmask 64512
    %v116 = vsel %vm114, %v86, 0
    %v119 = vsel %vm114, %v87, 0
    %v122 = vsel %vm114, %v88, 0
    %v125 = vsel %vm114, %v89, 0
    %v128 = vsel %vm114, %v90, 0
    %v131 = vsel %vm114, %v91, 0
    %v134 = vsel %vm114, %v92, 0
    %v137 = vsel %vm114, %v93, 0
    %v140 = vsel %vm114, %v94, 0
    %v143 = vsel %vm114, %v95, 0
    %v146 = vsel %vm114, %v96, 0
    %v149 = vsel %vm114, %v97, 0
    %v152 = vsel %vm114, %v98, 0
    %v155 = vsel %vm114, %v99, 0
    %v158 = vsel %vm114, %v100, 0
    %v161 = vsel %vm114, %v101, 0
    %v164 = vsel %vm114, %v102, 0
    %v167 = vsel %vm114, %v103, 0
    %v170 = vsel %vm114, %v104, 0
    %v173 = vsel %vm114, %v105, 0
    %v176 = vsel %vm114, %v106, 0
    %v179 = vsel %vm114, %v107, 0
    %v182 = vsel %vm114, %v108, 0
    %v185 = vsel %vm114, %v109, 0
    %v188 = vsel %vm114, %v110, 0
    %v191 = vsel %vm114, %v111, 0
    %v194 = vsel %vm114, %v112, 0
    %v197 = vsel %vm114, %v113, 0
    %199 = vmatpush.xpose.msra.mxu0 %v197
    %200 = vmatpush.xpose.msra.mxu0 %v194
    %201 = vmatpush.xpose.msra.mxu0 %v191
    %202 = vmatpush.xpose.msra.mxu0 %v188
    %203 = vmatpush.xpose.msra.mxu0 %v185
    %204 = vmatpush.xpose.msra.mxu0 %v182
    %205 = vmatpush.xpose.msra.mxu0 %v179
    %206 = vmatpush.xpose.msra.mxu0 %v176
    %207 = vmatpush.xpose.msra.mxu0 %v173
    %208 = vmatpush.xpose.msra.mxu0 %v170
    %209 = vmatpush.xpose.msra.mxu0 %v167
    %210 = vmatpush.xpose.msra.mxu0 %v164
    %211 = vmatpush.xpose.msra.mxu0 %v161
    %212 = vmatpush.xpose.msra.mxu0 %v158
    %213 = vmatpush.xpose.msra.mxu0 %v155
    %214 = vmatpush.xpose.msra.mxu0 %v152
    %215 = vmatmul.f32.gmra.mxu0 %v116
    %v216 = vpop.f32.mrf.mxu0
    %v217 = vadd.f32 0.0, %v216
    %218 = vmatmul.f32.gmra.mxu0 %v119
    %v219 = vpop.f32.mrf.mxu0
    %v220 = vadd.f32 0.0, %v219
    %221 = vmatmul.f32.gmra.mxu0 %v122
    %v222 = vpop.f32.mrf.mxu0
    %v223 = vadd.f32 0.0, %v222
    %224 = vmatmul.f32.gmra.mxu0 %v125
    %v225 = vpop.f32.mrf.mxu0
    %v226 = vadd.f32 0.0, %v225
    %227 = vmatmul.f32.gmra.mxu0 %v128
    %v228 = vpop.f32.mrf.mxu0
    %v229 = vadd.f32 0.0, %v228
    %230 = vmatmul.f32.gmra.mxu0 %v131
    %v231 = vpop.f32.mrf.mxu0
    %v232 = vadd.f32 0.0, %v231
    %233 = vmatmul.f32.gmra.mxu0 %v134
    %v234 = vpop.f32.mrf.mxu0
    %v235 = vadd.f32 0.0, %v234
    %236 = vmatmul.f32.gmra.mxu0 %v137
    %v237 = vpop.f32.mrf.mxu0
    %v238 = vadd.f32 0.0, %v237
    %239 = vmatmul.f32.gmra.mxu0 %v140
    %v240 = vpop.f32.mrf.mxu0
    %v241 = vadd.f32 0.0, %v240
    %242 = vmatmul.f32.gmra.mxu0 %v143
    %v243 = vpop.f32.mrf.mxu0
    %v244 = vadd.f32 0.0, %v243
    %245 = vmatmul.f32.gmra.mxu0 %v146
    %v246 = vpop.f32.mrf.mxu0
    %v247 = vadd.f32 0.0, %v246
    %248 = vmatmul.f32.gmra.mxu0 %v149
    %v249 = vpop.f32.mrf.mxu0
    %v250 = vadd.f32 0.0, %v249
    %251 = vdwg.mxu0
    %vm252 = vcmask 195584
    %v254 = vsel %vm252, %v58, 0
    %v257 = vsel %vm252, %v59, 0
    %v260 = vsel %vm252, %v60, 0
    %v263 = vsel %vm252, %v61, 0
    %v266 = vsel %vm252, %v62, 0
    %v269 = vsel %vm252, %v63, 0
    %v272 = vsel %vm252, %v64, 0
    %v275 = vsel %vm252, %v65, 0
    %v278 = vsel %vm252, %v66, 0
    %v281 = vsel %vm252, %v67, 0
    %v284 = vsel %vm252, %v68, 0
    %v287 = vsel %vm252, %v69, 0
    %v290 = vsel %vm252, %v70, 0
    %v293 = vsel %vm252, %v71, 0
    %v296 = vsel %vm252, %v72, 0
    %v299 = vsel %vm252, %v73, 0
    %v302 = vsel %vm252, %v74, 0
    %v305 = vsel %vm252, %v75, 0
    %v308 = vsel %vm252, %v76, 0
    %v311 = vsel %vm252, %v77, 0
    %v314 = vsel %vm252, %v78, 0
    %v317 = vsel %vm252, %v79, 0
    %v320 = vsel %vm252, %v80, 0
    %v323 = vsel %vm252, %v81, 0
    %v326 = vsel %vm252, %v82, 0
    %v329 = vsel %vm252, %v83, 0
    %v332 = vsel %vm252, %v84, 0
    %v335 = vsel %vm252, %v85, 0
    %337 = vmatpush.xpose.msra.mxu0 %v335
    %338 = vmatpush.xpose.msra.mxu0 %v332
    %339 = vmatpush.xpose.msra.mxu0 %v329
    %340 = vmatpush.xpose.msra.mxu0 %v326
    %341 = vmatpush.xpose.msra.mxu0 %v323
    %342 = vmatpush.xpose.msra.mxu0 %v320
    %343 = vmatpush.xpose.msra.mxu0 %v317
    %344 = vmatpush.xpose.msra.mxu0 %v314
    %345 = vmatpush.xpose.msra.mxu0 %v311
    %346 = vmatpush.xpose.msra.mxu0 %v308
    %347 = vmatpush.xpose.msra.mxu0 %v305
    %348 = vmatpush.xpose.msra.mxu0 %v302
    %349 = vmatpush.xpose.msra.mxu0 %v299
    %350 = vmatpush.xpose.msra.mxu0 %v296
    %351 = vmatpush.xpose.msra.mxu0 %v293
    %352 = vmatpush.xpose.msra.mxu0 %v290
    %353 = vmatmul.f32.gmra.mxu0 %v254
    %v354 = vpop.f32.mrf.mxu0
    %v355 = vadd.f32 %v217, %v354
    %356 = vmatmul.f32.gmra.mxu0 %v257
    %v357 = vpop.f32.mrf.mxu0
    %v358 = vadd.f32 %v220, %v357
    %359 = vmatmul.f32.gmra.mxu0 %v260
    %v360 = vpop.f32.mrf.mxu0
    %v361 = vadd.f32 %v223, %v360
    %362 = vmatmul.f32.gmra.mxu0 %v263
    %v363 = vpop.f32.mrf.mxu0
    %v364 = vadd.f32 %v226, %v363
    %365 = vmatmul.f32.gmra.mxu0 %v266
    %v366 = vpop.f32.mrf.mxu0
    %v367 = vadd.f32 %v229, %v366
    %368 = vmatmul.f32.gmra.mxu0 %v269
    %v369 = vpop.f32.mrf.mxu0
    %v370 = vadd.f32 %v232, %v369
    %371 = vmatmul.f32.gmra.mxu0 %v272
    %v372 = vpop.f32.mrf.mxu0
    %v373 = vadd.f32 %v235, %v372
    %374 = vmatmul.f32.gmra.mxu0 %v275
    %v375 = vpop.f32.mrf.mxu0
    %v376 = vadd.f32 %v238, %v375
    %377 = vmatmul.f32.gmra.mxu0 %v278
    %v378 = vpop.f32.mrf.mxu0
    %v379 = vadd.f32 %v241, %v378
    %380 = vmatmul.f32.gmra.mxu0 %v281
    %v381 = vpop.f32.mrf.mxu0
    %v382 = vadd.f32 %v244, %v381
    %383 = vmatmul.f32.gmra.mxu0 %v284
    %v384 = vpop.f32.mrf.mxu0
    %v385 = vadd.f32 %v247, %v384
    %386 = vmatmul.f32.gmra.mxu0 %v287
    %v387 = vpop.f32.mrf.mxu0
    %v388 = vadd.f32 %v250, %v387
    %389 = vdwg.mxu0
    %v390 = vld [vmem:[%s7] sm:$0xff]
    %v391 = vld [vmem:[%s7 + $0x8] sm:$0xff]
    %v392 = vld [vmem:[%s7 + $0x10] sm:$0xff]
    %v393 = vld [vmem:[%s7 + $0x18] sm:$0xff]
    %v394 = vld [vmem:[%s7 + $0x20] sm:$0xff]
    %v395 = vld [vmem:[%s7 + $0x28] sm:$0xff]
    %v396 = vld [vmem:[%s7 + $0x30] sm:$0xff]
    %v397 = vld [vmem:[%s7 + $0x38] sm:$0xff]
    %v398 = vld [vmem:[%s7 + $0x40] sm:$0xff]
    %v399 = vld [vmem:[%s7 + $0x48] sm:$0xff]
    %v400 = vld [vmem:[%s7 + $0x50] sm:$0xff]
    %v401 = vld [vmem:[%s7 + $0x58] sm:$0xff]
    %v402 = vld [vmem:[%s2] sm:$0xff]
    %v403 = vld [vmem:[%s2 + $0x8] sm:$0xff]
    %v404 = vld [vmem:[%s2 + $0x10] sm:$0xff]
    %v405 = vld [vmem:[%s2 + $0x18] sm:$0xff]
    %v406 = vld [vmem:[%s2 + $0x20] sm:$0xff]
    %v407 = vld [vmem:[%s2 + $0x28] sm:$0xff]
    %v408 = vld [vmem:[%s2 + $0x30] sm:$0xff]
    %v409 = vld [vmem:[%s2 + $0x38] sm:$0xff]
    %v410 = vld [vmem:[%s2 + $0x40] sm:$0xff]
    %v411 = vld [vmem:[%s2 + $0x48] sm:$0xff]
    %v412 = vld [vmem:[%s2 + $0x50] sm:$0xff]
    %v413 = vld [vmem:[%s2 + $0x58] sm:$0xff]
    %v414 = vld [vmem:[%s2 + $0x60] sm:$0xff]
    %v415 = vld [vmem:[%s2 + $0x68] sm:$0xff]
    %v416 = vld [vmem:[%s2 + $0x70] sm:$0xff]
    %v417 = vld [vmem:[%s2 + $0x78] sm:$0xff]
    %vm418 = vcmask 261120
    %v420 = vsel %vm418, %v390, 0
    %v423 = vsel %vm418, %v391, 0
    %v426 = vsel %vm418, %v392, 0
    %v429 = vsel %vm418, %v393, 0
    %v432 = vsel %vm418, %v394, 0
    %v435 = vsel %vm418, %v395, 0
    %v438 = vsel %vm418, %v396, 0
    %v441 = vsel %vm418, %v397, 0
    %v444 = vsel %vm418, %v398, 0
    %v447 = vsel %vm418, %v399, 0
    %v450 = vsel %vm418, %v400, 0
    %v453 = vsel %vm418, %v401, 0
    %v456 = vsel %vm418, %v402, 0
    %v459 = vsel %vm418, %v403, 0
    %v462 = vsel %vm418, %v404, 0
    %v465 = vsel %vm418, %v405, 0
    %v468 = vsel %vm418, %v406, 0
    %v471 = vsel %vm418, %v407, 0
    %v474 = vsel %vm418, %v408, 0
    %v477 = vsel %vm418, %v409, 0
    %v480 = vsel %vm418, %v410, 0
    %v483 = vsel %vm418, %v411, 0
    %v486 = vsel %vm418, %v412, 0
    %v489 = vsel %vm418, %v413, 0
    %v492 = vsel %vm418, %v414, 0
    %v495 = vsel %vm418, %v415, 0
    %v498 = vsel %vm418, %v416, 0
    %v501 = vsel %vm418, %v417, 0
    %503 = vmatpush.xpose.msra.mxu0 %v501
    %504 = vmatpush.xpose.msra.mxu0 %v498
    %505 = vmatpush.xpose.msra.mxu0 %v495
    %506 = vmatpush.xpose.msra.mxu0 %v492
    %507 = vmatpush.xpose.msra.mxu0 %v489
    %508 = vmatpush.xpose.msra.mxu0 %v486
    %509 = vmatpush.xpose.msra.mxu0 %v483
    %510 = vmatpush.xpose.msra.mxu0 %v480
    %511 = vmatpush.xpose.msra.mxu0 %v477
    %512 = vmatpush.xpose.msra.mxu0 %v474
    %513 = vmatpush.xpose.msra.mxu0 %v471
    %514 = vmatpush.xpose.msra.mxu0 %v468
    %515 = vmatpush.xpose.msra.mxu0 %v465
    %516 = vmatpush.xpose.msra.mxu0 %v462
    %517 = vmatpush.xpose.msra.mxu0 %v459
    %518 = vmatpush.xpose.msra.mxu0 %v456
    %519 = vmatmul.f32.gmra.mxu0 %v420
    %v520 = vpop.f32.mrf.mxu0
    %v521 = vadd.f32 0.0, %v520
    %522 = vmatmul.f32.gmra.mxu0 %v423
    %v523 = vpop.f32.mrf.mxu0
    %v524 = vadd.f32 0.0, %v523
    %525 = vmatmul.f32.gmra.mxu0 %v426
    %v526 = vpop.f32.mrf.mxu0
    %v527 = vadd.f32 0.0, %v526
    %528 = vmatmul.f32.gmra.mxu0 %v429
    %v529 = vpop.f32.mrf.mxu0
    %v530 = vadd.f32 0.0, %v529
    %531 = vmatmul.f32.gmra.mxu0 %v432
    %v532 = vpop.f32.mrf.mxu0
    %v533 = vadd.f32 0.0, %v532
    %534 = vmatmul.f32.gmra.mxu0 %v435
    %v535 = vpop.f32.mrf.mxu0
    %v536 = vadd.f32 0.0, %v535
    %537 = vmatmul.f32.gmra.mxu0 %v438
    %v538 = vpop.f32.mrf.mxu0
    %v539 = vadd.f32 0.0, %v538
    %540 = vmatmul.f32.gmra.mxu0 %v441
    %v541 = vpop.f32.mrf.mxu0
    %v542 = vadd.f32 0.0, %v541
    %543 = vmatmul.f32.gmra.mxu0 %v444
    %v544 = vpop.f32.mrf.mxu0
    %v545 = vadd.f32 0.0, %v544
    %546 = vmatmul.f32.gmra.mxu0 %v447
    %v547 = vpop.f32.mrf.mxu0
    %v548 = vadd.f32 0.0, %v547
    %549 = vmatmul.f32.gmra.mxu0 %v450
    %v550 = vpop.f32.mrf.mxu0
    %v551 = vadd.f32 0.0, %v550
    %552 = vmatmul.f32.gmra.mxu0 %v453
    %v553 = vpop.f32.mrf.mxu0
    %v554 = vadd.f32 0.0, %v553
    %555 = vdwg.mxu0
    %v556 = vadd.f32 %v355, %v521
    %v557 = vadd.f32 %v358, %v524
    %v558 = vadd.f32 %v361, %v527
    %v559 = vadd.f32 %v364, %v530
    %v560 = vadd.f32 %v367, %v533
    %v561 = vadd.f32 %v370, %v536
    %v562 = vadd.f32 %v373, %v539
    %v563 = vadd.f32 %v376, %v542
    %v564 = vadd.f32 %v379, %v545
    %v565 = vadd.f32 %v382, %v548
    %v566 = vadd.f32 %v385, %v551
    %v567 = vadd.f32 %v388, %v554
    %v568 = vld [vmem:[%s6] sm:$0xff]
    %v569 = vld [vmem:[%s6 + $0x8] sm:$0xff]
    %v570 = vld [vmem:[%s6 + $0x10] sm:$0xff]
    %v571 = vld [vmem:[%s6 + $0x18] sm:$0xff]
    %v572 = vld [vmem:[%s6 + $0x20] sm:$0xff]
    %v573 = vld [vmem:[%s6 + $0x28] sm:$0xff]
    %v574 = vld [vmem:[%s6 + $0x30] sm:$0xff]
    %v575 = vld [vmem:[%s6 + $0x38] sm:$0xff]
    %v576 = vld [vmem:[%s6 + $0x40] sm:$0xff]
    %v577 = vld [vmem:[%s6 + $0x48] sm:$0xff]
    %v578 = vld [vmem:[%s6 + $0x50] sm:$0xff]
    %v579 = vld [vmem:[%s6 + $0x58] sm:$0xff]
    %vm580 = vcmask 31744
    %v582 = vsel %vm580, %v568, 0
    %v585 = vsel %vm580, %v569, 0
    %v588 = vsel %vm580, %v570, 0
    %v591 = vsel %vm580, %v571, 0
    %v594 = vsel %vm580, %v572, 0
    %v597 = vsel %vm580, %v573, 0
    %v600 = vsel %vm580, %v574, 0
    %v603 = vsel %vm580, %v575, 0
    %v606 = vsel %vm580, %v576, 0
    %v609 = vsel %vm580, %v577, 0
    %v612 = vsel %vm580, %v578, 0
    %v615 = vsel %vm580, %v579, 0
    %vm617 = vcmask 1043456
    %v619 = vsel %vm617, %v57, 0
    %621 = vmatpush.msra.mxu0 0.0
    %622 = vmatpush.msra.mxu0 0.0
    %623 = vmatpush.msra.mxu0 0.0
    %624 = vmatpush.msra.mxu0 0.0
    %625 = vmatpush.msra.mxu0 0.0
    %626 = vmatpush.msra.mxu0 0.0
    %627 = vmatpush.msra.mxu0 0.0
    %628 = vmatpush.msra.mxu0 0.0
    %629 = vmatpush.msra.mxu0 0.0
    %630 = vmatpush.msra.mxu0 0.0
    %631 = vmatpush.msra.mxu0 0.0
    %632 = vmatpush.msra.mxu0 0.0
    %633 = vmatpush.msra.mxu0 0.0
    %634 = vmatpush.msra.mxu0 0.0
    %635 = vmatpush.msra.mxu0 0.0
    %636 = vmatpush.msra.mxu0 %v619
    %637 = vmatmul.f32.gmra.mxu0 %v582
    %v638 = vpop.f32.mrf.mxu0
    %v639 = vadd.f32 0.0, %v638
    %640 = vmatmul.f32.gmra.mxu0 %v585
    %v641 = vpop.f32.mrf.mxu0
    %v642 = vadd.f32 0.0, %v641
    %643 = vmatmul.f32.gmra.mxu0 %v588
    %v644 = vpop.f32.mrf.mxu0
    %v645 = vadd.f32 0.0, %v644
    %646 = vmatmul.f32.gmra.mxu0 %v591
    %v647 = vpop.f32.mrf.mxu0
    %v648 = vadd.f32 0.0, %v647
    %649 = vmatmul.f32.gmra.mxu0 %v594
    %v650 = vpop.f32.mrf.mxu0
    %v651 = vadd.f32 0.0, %v650
    %652 = vmatmul.f32.gmra.mxu0 %v597
    %v653 = vpop.f32.mrf.mxu0
    %v654 = vadd.f32 0.0, %v653
    %655 = vmatmul.f32.gmra.mxu0 %v600
    %v656 = vpop.f32.mrf.mxu0
    %v657 = vadd.f32 0.0, %v656
    %658 = vmatmul.f32.gmra.mxu0 %v603
    %v659 = vpop.f32.mrf.mxu0
    %v660 = vadd.f32 0.0, %v659
    %661 = vmatmul.f32.gmra.mxu0 %v606
    %v662 = vpop.f32.mrf.mxu0
    %v663 = vadd.f32 0.0, %v662
    %664 = vmatmul.f32.gmra.mxu0 %v609
    %v665 = vpop.f32.mrf.mxu0
    %v666 = vadd.f32 0.0, %v665
    %667 = vmatmul.f32.gmra.mxu0 %v612
    %v668 = vpop.f32.mrf.mxu0
    %v669 = vadd.f32 0.0, %v668
    %670 = vmatmul.f32.gmra.mxu0 %v615
    %v671 = vpop.f32.mrf.mxu0
    %v672 = vadd.f32 0.0, %v671
    %673 = vdwg.mxu0
    %v674 = vadd.f32 %v556, %v639
    %v675 = vadd.f32 %v557, %v642
    %v676 = vadd.f32 %v558, %v645
    %v677 = vadd.f32 %v559, %v648
    %v678 = vadd.f32 %v560, %v651
    %v679 = vadd.f32 %v561, %v654
    %v680 = vadd.f32 %v562, %v657
    %v681 = vadd.f32 %v563, %v660
    %v682 = vadd.f32 %v564, %v663
    %v683 = vadd.f32 %v565, %v666
    %v684 = vadd.f32 %v566, %v669
    %v685 = vadd.f32 %v567, %v672
    %v686 = vld [vmem:[%s8] sm:$0xff]
    %v687 = vld [vmem:[%s8 + $0x8] sm:$0xff]
    %v688 = vld [vmem:[%s8 + $0x10] sm:$0xff]
    %v689 = vld [vmem:[%s8 + $0x18] sm:$0xff]
    %v690 = vld [vmem:[%s8 + $0x20] sm:$0xff]
    %v691 = vld [vmem:[%s8 + $0x28] sm:$0xff]
    %v692 = vld [vmem:[%s8 + $0x30] sm:$0xff]
    %v693 = vld [vmem:[%s8 + $0x38] sm:$0xff]
    %v694 = vld [vmem:[%s8 + $0x40] sm:$0xff]
    %v695 = vld [vmem:[%s8 + $0x48] sm:$0xff]
    %v696 = vld [vmem:[%s8 + $0x50] sm:$0xff]
    %v697 = vld [vmem:[%s8 + $0x58] sm:$0xff]
    %699 = vset.pattern.permute.xlu0 0
    %700 = vperm.xlu0 %699, %v686
    %v701 = vpop.permute.xlu0 %700
    %704 = vset.pattern.permute.xlu0 0
    %705 = vperm.xlu0 %704, %v687
    %v706 = vpop.permute.xlu0 %705
    %709 = vset.pattern.permute.xlu0 0
    %710 = vperm.xlu0 %709, %v688
    %v711 = vpop.permute.xlu0 %710
    %714 = vset.pattern.permute.xlu0 0
    %715 = vperm.xlu0 %714, %v689
    %v716 = vpop.permute.xlu0 %715
    %719 = vset.pattern.permute.xlu0 0
    %720 = vperm.xlu0 %719, %v690
    %v721 = vpop.permute.xlu0 %720
    %724 = vset.pattern.permute.xlu0 0
    %725 = vperm.xlu0 %724, %v691
    %v726 = vpop.permute.xlu0 %725
    %729 = vset.pattern.permute.xlu0 0
    %730 = vperm.xlu0 %729, %v692
    %v731 = vpop.permute.xlu0 %730
    %734 = vset.pattern.permute.xlu0 0
    %735 = vperm.xlu0 %734, %v693
    %v736 = vpop.permute.xlu0 %735
    %739 = vset.pattern.permute.xlu0 0
    %740 = vperm.xlu0 %739, %v694
    %v741 = vpop.permute.xlu0 %740
    %744 = vset.pattern.permute.xlu0 0
    %745 = vperm.xlu0 %744, %v695
    %v746 = vpop.permute.xlu0 %745
    %749 = vset.pattern.permute.xlu0 0
    %750 = vperm.xlu0 %749, %v696
    %v751 = vpop.permute.xlu0 %750
    %754 = vset.pattern.permute.xlu0 0
    %755 = vperm.xlu0 %754, %v697
    %v756 = vpop.permute.xlu0 %755
    %v758 = vadd.f32 %v674, %v701
    %v759 = vadd.f32 %v675, %v706
    %v760 = vadd.f32 %v676, %v711
    %v761 = vadd.f32 %v677, %v716
    %v762 = vadd.f32 %v678, %v721
    %v763 = vadd.f32 %v679, %v726
    %v764 = vadd.f32 %v680, %v731
    %v765 = vadd.f32 %v681, %v736
    %v766 = vadd.f32 %v682, %v741
    %v767 = vadd.f32 %v683, %v746
    %v768 = vadd.f32 %v684, %v751
    %v769 = vadd.f32 %v685, %v756
    %v770 = vld [vmem:[%s13] sm:$0xff]
    %v771 = vld [vmem:[%s13 + $0x8] sm:$0xff]
    %v772 = vld [vmem:[%s13 + $0x10] sm:$0xff]
    %v773 = vld [vmem:[%s13 + $0x18] sm:$0xff]
    %v774 = vld [vmem:[%s14] sm:$0xff]
    %v775 = vld [vmem:[%s14 + $0x8] sm:$0xff]
    %v776 = vld [vmem:[%s14 + $0x10] sm:$0xff]
    %v777 = vld [vmem:[%s14 + $0x18] sm:$0xff]
    %v778 = vadd.f32 %v758, %v759
    %v779 = vadd.f32 %v778, %v760
    %v780 = vadd.f32 %v779, %v761
    %v781 = vrot.slane %v780, 4
    %v782 = vadd.f32 %v780, %v781
    %v783 = vrot.slane %v782, 2
    %v784 = vadd.f32 %v782, %v783
    %v785 = vrot.slane %v784, 1
    %v786 = vadd.f32 %v784, %v785
    %v787 = vrcp.pop 32.0
    %v788 = vmul.f32 32.0, %v787
    %v789 = vsub.f32 1.0, %v788
    %v790 = vmul.f32 %v787, %v789
    %v791 = vadd.f32 %v787, %v790
    %vm792 = vweird.f32 %v787
    %v793 = vsel %vm792, %v787, %v791
    %v794 = vmul.f32 %v786, %v793
    %v795 = vsub.f32 %v758, %v794
    %v796 = vsub.f32 %v759, %v794
    %v797 = vsub.f32 %v760, %v794
    %v798 = vsub.f32 %v761, %v794
    %v799 = vmul.f32 %v795, %v795
    %v800 = vmul.f32 %v796, %v796
    %v801 = vmul.f32 %v797, %v797
    %v802 = vmul.f32 %v798, %v798
    %v803 = vadd.f32 %v799, %v800
    %v804 = vadd.f32 %v803, %v801
    %v805 = vadd.f32 %v804, %v802
    %v806 = vrot.slane %v805, 4
    %v807 = vadd.f32 %v805, %v806
    %v808 = vrot.slane %v807, 2
    %v809 = vadd.f32 %v807, %v808
    %v810 = vrot.slane %v809, 1
    %v811 = vadd.f32 %v809, %v810
    %v812 = vmul.f32 %v811, %v793
    %v813 = vadd.f32 %v812, 1e-05
    %v814 = vrsqrt.pop %v813
    %v815 = vmul.f32 %v814, %v813
    %v816 = vmul.f32 %v815, %v814
    %v817 = vmul.f32 0.5, %v816
    %v818 = vsub.f32 1.5, %v817
    %v819 = vmul.f32 %v814, %v818
    %vm820 = vweird.f32 %v813
    %vm821 = vweird.f32 %v814
    %vm822 = vmor %vm820, %vm821
    %v823 = vsel %vm822, %v814, %v819
    %v824 = vmul.f32 %v795, %v823
    %v825 = vmul.f32 %v796, %v823
    %v826 = vmul.f32 %v797, %v823
    %v827 = vmul.f32 %v798, %v823
    %829 = vset.pattern.permute.xlu0 0
    %830 = vperm.xlu0 %829, %v770
    %v831 = vpop.permute.xlu0 %830
    %834 = vset.pattern.permute.xlu0 0
    %835 = vperm.xlu0 %834, %v771
    %v836 = vpop.permute.xlu0 %835
    %839 = vset.pattern.permute.xlu0 0
    %840 = vperm.xlu0 %839, %v772
    %v841 = vpop.permute.xlu0 %840
    %844 = vset.pattern.permute.xlu0 0
    %845 = vperm.xlu0 %844, %v773
    %v846 = vpop.permute.xlu0 %845
    %v848 = vmul.f32 %v824, %v831
    %v849 = vmul.f32 %v825, %v836
    %v850 = vmul.f32 %v826, %v841
    %v851 = vmul.f32 %v827, %v846
    %853 = vset.pattern.permute.xlu0 0
    %854 = vperm.xlu0 %853, %v774
    %v855 = vpop.permute.xlu0 %854
    %858 = vset.pattern.permute.xlu0 0
    %859 = vperm.xlu0 %858, %v775
    %v860 = vpop.permute.xlu0 %859
    %863 = vset.pattern.permute.xlu0 0
    %864 = vperm.xlu0 %863, %v776
    %v865 = vpop.permute.xlu0 %864
    %868 = vset.pattern.permute.xlu0 0
    %869 = vperm.xlu0 %868, %v777
    %v870 = vpop.permute.xlu0 %869
    %v872 = vadd.f32 %v848, %v855
    %v873 = vadd.f32 %v849, %v860
    %v874 = vadd.f32 %v850, %v865
    %v875 = vadd.f32 %v851, %v870
    %v876 = vmax.f32 %v872, 0.0
    %v877 = vmax.f32 %v873, 0.0
    %v878 = vmax.f32 %v874, 0.0
    %v879 = vmax.f32 %v875, 0.0
    %v880 = vadd.f32 %v762, %v763
    %v881 = vadd.f32 %v880, %v764
    %v882 = vadd.f32 %v881, %v765
    %v883 = vrot.slane %v882, 4
    %v884 = vadd.f32 %v882, %v883
    %v885 = vrot.slane %v884, 2
    %v886 = vadd.f32 %v884, %v885
    %v887 = vrot.slane %v886, 1
    %v888 = vadd.f32 %v886, %v887
    %v889 = vmul.f32 %v888, %v793
    %v890 = vsub.f32 %v762, %v889
    %v891 = vsub.f32 %v763, %v889
    %v892 = vsub.f32 %v764, %v889
    %v893 = vsub.f32 %v765, %v889
    %v894 = vmul.f32 %v890, %v890
    %v895 = vmul.f32 %v891, %v891
    %v896 = vmul.f32 %v892, %v892
    %v897 = vmul.f32 %v893, %v893
    %v898 = vadd.f32 %v894, %v895
    %v899 = vadd.f32 %v898, %v896
    %v900 = vadd.f32 %v899, %v897
    %v901 = vrot.slane %v900, 4
    %v902 = vadd.f32 %v900, %v901
    %v903 = vrot.slane %v902, 2
    %v904 = vadd.f32 %v902, %v903
    %v905 = vrot.slane %v904, 1
    %v906 = vadd.f32 %v904, %v905
    %v907 = vmul.f32 %v906, %v793
    %v908 = vadd.f32 %v907, 1e-05
    %v909 = vrsqrt.pop %v908
    %v910 = vmul.f32 %v909, %v908
    %v911 = vmul.f32 %v910, %v909
    %v912 = vmul.f32 0.5, %v911
    %v913 = vsub.f32 1.5, %v912
    %v914 = vmul.f32 %v909, %v913
    %vm915 = vweird.f32 %v908
    %vm916 = vweird.f32 %v909
    %vm917 = vmor %vm915, %vm916
    %v918 = vsel %vm917, %v909, %v914
    %v919 = vmul.f32 %v890, %v918
    %v920 = vmul.f32 %v891, %v918
    %v921 = vmul.f32 %v892, %v918
    %v922 = vmul.f32 %v893, %v918
    %v923 = vmul.f32 %v919, %v831
    %v924 = vmul.f32 %v920, %v836
    %v925 = vmul.f32 %v921, %v841
    %v926 = vmul.f32 %v922, %v846
    %v927 = vadd.f32 %v923, %v855
    %v928 = vadd.f32 %v924, %v860
    %v929 = vadd.f32 %v925, %v865
    %v930 = vadd.f32 %v926, %v870
    %v931 = vmax.f32 %v927, 0.0
    %v932 = vmax.f32 %v928, 0.0
    %v933 = vmax.f32 %v929, 0.0
    %v934 = vmax.f32 %v930, 0.0
    %v935 = vld [vmem:[%s9] sm:$0xff]
    %v936 = vld [vmem:[%s9 + $0x8] sm:$0xff]
    %v937 = vld [vmem:[%s9 + $0x10] sm:$0xff]
    %v938 = vld [vmem:[%s9 + $0x18] sm:$0xff]
    %vm939 = vcmask 523264
    %v941 = vsel %vm939, %v935, 0
    %v944 = vsel %vm939, %v936, 0
    %v947 = vsel %vm939, %v937, 0
    %v950 = vsel %vm939, %v938, 0
    %952 = vmatpush.msra.mxu0 0.0
    %953 = vmatpush.msra.mxu0 0.0
    %954 = vmatpush.msra.mxu0 0.0
    %955 = vmatpush.msra.mxu0 0.0
    %956 = vmatpush.msra.mxu0 0.0
    %957 = vmatpush.msra.mxu0 0.0
    %958 = vmatpush.msra.mxu0 0.0
    %959 = vmatpush.msra.mxu0 0.0
    %960 = vmatpush.msra.mxu0 %v934
    %961 = vmatpush.msra.mxu0 %v933
    %962 = vmatpush.msra.mxu0 %v932
    %963 = vmatpush.msra.mxu0 %v931
    %964 = vmatpush.msra.mxu0 %v879
    %965 = vmatpush.msra.mxu0 %v878
    %966 = vmatpush.msra.mxu0 %v877
    %967 = vmatpush.msra.mxu0 %v876
    %968 = vmatmul.f32.gmra.mxu0 %v941
    %v969 = vpop.f32.mrf.mxu0
    %v970 = vadd.f32 %v766, %v969
    %971 = vmatmul.f32.gmra.mxu0 %v944
    %v972 = vpop.f32.mrf.mxu0
    %v973 = vadd.f32 %v767, %v972
    %974 = vmatmul.f32.gmra.mxu0 %v947
    %v975 = vpop.f32.mrf.mxu0
    %v976 = vadd.f32 %v768, %v975
    %977 = vmatmul.f32.gmra.mxu0 %v950
    %v978 = vpop.f32.mrf.mxu0
    %v979 = vadd.f32 %v769, %v978
    %980 = vdwg.mxu0
    %v981 = vld [vmem:[%s10] sm:$0xff]
    %v982 = vld [vmem:[%s10 + $0x8] sm:$0xff]
    %v983 = vld [vmem:[%s10 + $0x10] sm:$0xff]
    %v984 = vld [vmem:[%s10 + $0x18] sm:$0xff]
    %986 = vset.pattern.permute.xlu0 0
    %987 = vperm.xlu0 %986, %v981
    %v988 = vpop.permute.xlu0 %987
    %991 = vset.pattern.permute.xlu0 0
    %992 = vperm.xlu0 %991, %v982
    %v993 = vpop.permute.xlu0 %992
    %996 = vset.pattern.permute.xlu0 0
    %997 = vperm.xlu0 %996, %v983
    %v998 = vpop.permute.xlu0 %997
    %1001 = vset.pattern.permute.xlu0 0
    %1002 = vperm.xlu0 %1001, %v984
    %v1003 = vpop.permute.xlu0 %1002
    %v1005 = vadd.f32 %v970, %v988
    %v1006 = vadd.f32 %v973, %v993
    %v1007 = vadd.f32 %v976, %v998
    %v1008 = vadd.f32 %v979, %v1003
    %v1009 = vmax.f32 %v1005, 0.0
    %v1010 = vmax.f32 %v1006, 0.0
    %v1011 = vmax.f32 %v1007, 0.0
    %v1012 = vmax.f32 %v1008, 0.0
    %v1013 = vld [vmem:[%s11] sm:$0xff]
    %v1014 = vld [vmem:[%s12] sm:$0xff]
    %1016 = vset.pattern.permute.xlu0 0
    %1017 = vperm.xlu0 %1016, %v1014
    %v1018 = vpop.permute.xlu0 %1017
    %v1021 = vsel %vm418, %v1013, 0
    %1023 = vmatpush.msra.mxu0 0.0
    %1024 = vmatpush.msra.mxu0 0.0
    %1025 = vmatpush.msra.mxu0 0.0
    %1026 = vmatpush.msra.mxu0 0.0
    %1027 = vmatpush.msra.mxu0 0.0
    %1028 = vmatpush.msra.mxu0 0.0
    %1029 = vmatpush.msra.mxu0 0.0
    %1030 = vmatpush.msra.mxu0 0.0
    %1031 = vmatpush.msra.mxu0 0.0
    %1032 = vmatpush.msra.mxu0 0.0
    %1033 = vmatpush.msra.mxu0 0.0
    %1034 = vmatpush.msra.mxu0 0.0
    %1035 = vmatpush.msra.mxu0 %v1012
    %1036 = vmatpush.msra.mxu0 %v1011
    %1037 = vmatpush.msra.mxu0 %v1010
    %1038 = vmatpush.msra.mxu0 %v1009
    %1039 = vmatmul.f32.gmra.mxu0 %v1021
    %v1040 = vpop.f32.mrf.mxu0
    %v1041 = vadd.f32 %v1018, %v1040
    %1042 = vdwg.mxu0
    %1043 = vst [vmem:[#allocation2] sm:$0xff] %v1041
    // Predicated region
    $region62: #{tpu_custom_call.1} parent=1 // pred_check
      _
    $region63: #{tpu_custom_call.1} parent=1 // pred_check_branch
      %1045 = sbr.rel (0) target = $region65
    $region64: #{tpu_custom_call.1} parent=1 // pred_region
      %1047 = vsyncadd [#allocation3], 0
      %s1049 = sshll.u32 [#allocation2], 4
      %s1050 = int_to_ptr.vmem [resolvable:$true] %s1049
      %s1051 = sshll.u32 %s15, 4
      %s1052 = int_to_ptr.hbm [resolvable:$true] %s1051
      %1054 = dma.vmem_to_hbm [thread:$0]  %s1050, 128, %s1052, [#allocation3]
    $region65: #{tpu_custom_call.1} parent=1 // pred_fallthru
      _
    // Predicated region
    $region66: #{tpu_custom_call.1} parent=1 // pred_check
      _
    $region67: #{tpu_custom_call.1} parent=1 // pred_check_branch
      %1056 = sbr.rel (0) target = $region69
    $region68: #{tpu_custom_call.1} parent=1 // pred_region
      %1058 = dma.done [#allocation3], 128
    $region69: #{tpu_custom_call.1} parent=1 // pred_fallthru
      _
    %1059 = vsyncpa [#allocation3], 1

</llo_original>
